<compile_context>
chip_gen: v7x
topology: tpu7x:2x2x1
jax: 0.10.0
libtpu: 0.0.40
codegen_flags: <defaults>
</compile_context>

<pallas_src>
import functools

import jax
import jax.numpy as jnp
from jax.experimental import pallas as pl
from jax.experimental.pallas import tpu as pltpu

_EPS = 1e-12              # torch F.normalize default eps
_EPS_SQ = _EPS * _EPS     # max(sqrt(x), eps) == sqrt(max(x, eps^2))


def _contrastive_kernel(a_ref, n_ref, out_ref, *, temperature, batch):
    """One [tile_b, D] slab of rows -> per-row loss (padded rows -> 0)."""
    tile_b = a_ref.shape[0]
    i = pl.program_id(0)

    a = a_ref[...].astype(jnp.float32)
    n = n_ref[...].astype(jnp.float32)

    # Three row reductions are all that is needed; everything else is per-row
    # scalar math (no full-tile normalization / divides).
    s_aa = jnp.sum(a * a, axis=-1, keepdims=True)   # [tile_b, 1]
    s_nn = jnp.sum(n * n, axis=-1, keepdims=True)
    s_an = jnp.sum(a * n, axis=-1, keepdims=True)

    inv_t = jnp.float32(1.0 / temperature)
    # 1 / max(||x||, eps)  ==  rsqrt(max(||x||^2, eps^2))   (EUP, not VALU div)
    inv_a = jax.lax.rsqrt(jnp.maximum(s_aa, jnp.float32(_EPS_SQ)))
    inv_n = jax.lax.rsqrt(jnp.maximum(s_nn, jnp.float32(_EPS_SQ)))

    pos_logit = s_an * (inv_a * inv_n) * inv_t
    neg_logit = s_aa * (inv_a * inv_a) * inv_t

    # -log(pos / (pos + neg)) == softplus(neg_logit - pos_logit); the argument
    # is always >= 0 so plain log(1 + exp(.)) is safe (no overflow: <= 2/T).
    row_loss = jnp.log(1.0 + jnp.exp(neg_logit - pos_logit))     # [tile_b, 1]

    # Mask rows of the (possibly partial) tail tile; they contribute 0.
    row_id = i * tile_b + jax.lax.broadcasted_iota(jnp.int32, (tile_b, 1), 0)
    out_ref[...] = jnp.where(row_id < batch, row_loss, jnp.float32(0.0))


def _sublane_multiple(dtype) -> int:
    itemsize = jnp.dtype(dtype).itemsize
    return {4: 8, 2: 16, 1: 32}.get(itemsize, 8)


def _choose_tile_b(batch, d, dtype, sub):
    """Largest batch tile whose double-buffered inputs fit a safe VMEM budget."""
    itemsize = jnp.dtype(dtype).itemsize
    # 2 inputs x 2 pipeline buffers; ~12 MiB is safe even under v5e's 16 MiB
    # default scoped-VMEM limit and leaves headroom on v7x (64 MiB physical).
    budget_bytes = 12 * 1024 * 1024
    per_row_bytes = 2 * 2 * d * itemsize
    max_rows = max(sub, (budget_bytes // per_row_bytes) // sub * sub)
    b_pad = pl.cdiv(batch, sub) * sub
    return int(min(max_rows, b_pad))


def contrastive_loss(anomaly_feats, normal_feats, temperature=0.07, tile_b=None):
    """Pallas implementation of ContrastiveLoss.forward. Inputs: [B, D]."""
    assert anomaly_feats.shape == normal_feats.shape
    assert anomaly_feats.dtype == normal_feats.dtype
    B, D = anomaly_feats.shape

    sub = _sublane_multiple(anomaly_feats.dtype)
    if tile_b is None:
        tile_b = _choose_tile_b(B, D, anomaly_feats.dtype, sub)
    else:
        tile_b = max(sub, -(-int(tile_b) // sub) * sub)  # round to sublane multiple

    num_tiles = int(pl.cdiv(B, tile_b))
    b_pad = num_tiles * tile_b

    kernel = functools.partial(
        _contrastive_kernel, temperature=float(temperature), batch=B
    )

    per_row_loss = pl.pallas_call(
        kernel,
        out_shape=jax.ShapeDtypeStruct((b_pad, 1), jnp.float32),
        grid_spec=pltpu.PrefetchScalarGridSpec(
            num_scalar_prefetch=0,
            grid=(num_tiles,),
            in_specs=[
                pl.BlockSpec((tile_b, D), lambda i: (i, 0)),
                pl.BlockSpec((tile_b, D), lambda i: (i, 0)),
            ],
            # Distinct output block per grid step -> the batch axis can be
            # "parallel" (v7x shards the grid across both TensorCores).
            out_specs=pl.BlockSpec((tile_b, 1), lambda i: (i, 0)),
        ),
        compiler_params=pltpu.CompilerParams(
            dimension_semantics=("parallel",),
            vmem_limit_bytes=32 * 1024 * 1024,
        ),
    )(anomaly_feats, normal_feats)

    # Tiny [B_pad, 1] partial result; final mean in plain JAX (padded rows are
    # already zeroed, divide by the true batch size).
    return jnp.sum(per_row_loss) / jnp.float32(B)


def _reference_loss(anomaly_feats, normal_feats, temperature=0.07):
    a = anomaly_feats.astype(jnp.float32)
    n = normal_feats.astype(jnp.float32)
    a = a / jnp.maximum(jnp.linalg.norm(a, axis=-1, keepdims=True), _EPS)
    n = n / jnp.maximum(jnp.linalg.norm(n, axis=-1, keepdims=True), _EPS)
    pos = jnp.exp(jnp.sum(a * n, axis=-1) / temperature)
    neg = jnp.exp(jnp.sum(a * a, axis=-1) / temperature)
    return jnp.mean(-jnp.log(pos / (pos + neg)))


if __name__ == "__main__":
    key = jax.random.PRNGKey(0)
    k1, k2, k3, k4, k5, k6 = jax.random.split(key, 6)

    # 1) Small f32 case, auto tile size.
    B, D = 16, 128
    anomaly = jax.random.normal(k1, (B, D), dtype=jnp.float32)
    normal = jax.random.normal(k2, (B, D), dtype=jnp.float32)
    loss = jax.block_until_ready(contrastive_loss(anomaly, normal, 0.07))
    ref = jax.block_until_ready(_reference_loss(anomaly, normal, 0.07))
    assert jnp.allclose(loss, ref, rtol=1e-5, atol=1e-5), (loss, ref)

    # 2) Batch not divisible by the tile: exercises tail-row masking + true-B mean.
    B2, D2 = 200, 256
    anomaly2 = jax.random.normal(k3, (B2, D2), dtype=jnp.float32)
    normal2 = jax.random.normal(k4, (B2, D2), dtype=jnp.float32)
    loss2 = jax.block_until_ready(contrastive_loss(anomaly2, normal2, 0.07, tile_b=64))
    ref2 = jax.block_until_ready(_reference_loss(anomaly2, normal2, 0.07))
    assert jnp.allclose(loss2, ref2, rtol=1e-5, atol=1e-5), (loss2, ref2)

    # 3) bf16 inputs stay bf16 in HBM (half the bytes); f32 math inside the kernel.
    B3, D3 = 256, 128
    anomaly3 = jax.random.normal(k5, (B3, D3), dtype=jnp.bfloat16)
    normal3 = jax.random.normal(k6, (B3, D3), dtype=jnp.bfloat16)
    loss3 = jax.block_until_ready(contrastive_loss(anomaly3, normal3, 0.07))
    ref3 = jax.block_until_ready(_reference_loss(anomaly3, normal3, 0.07))
    assert jnp.allclose(loss3, ref3, rtol=1e-4, atol=1e-4), (loss3, ref3)

    print("KERNEL_OK")
</pallas_src>

<mosaic_0001>
module attributes {stable_mosaic.version = 11 : i64} {
  func.func @_contrastive_kernel(%arg0: i32, %arg1: memref<16x128xf32, #tpu.memory_space<vmem>>, %arg2: memref<16x128xf32, #tpu.memory_space<vmem>>, %arg3: memref<16x1xf32, #tpu.memory_space<vmem>>) attributes {dimension_semantics = [#tpu.dimension_semantics<parallel>], iteration_bounds = array<i64: 1>, scalar_prefetch = 0 : i64, scratch_operands = 0 : i64, tpu.core_type = #tpu.core_type<tc>, window_params = [{transform_indices = @transform_0, window_bounds = array<i64: 16, 128>}, {transform_indices = @transform_1, window_bounds = array<i64: 16, 128>}, {transform_indices = @transform_2, window_bounds = array<i64: 16, 1>}]} {
    %c0 = arith.constant 0 : index
    %c0_0 = arith.constant 0 : index
    %0 = vector.load %arg1[%c0, %c0_0] : memref<16x128xf32, #tpu.memory_space<vmem>>, vector<16x128xf32>
    %c0_1 = arith.constant 0 : index
    %c0_2 = arith.constant 0 : index
    %1 = vector.load %arg2[%c0_1, %c0_2] : memref<16x128xf32, #tpu.memory_space<vmem>>, vector<16x128xf32>
    %2 = arith.mulf %0, %0 : vector<16x128xf32>
    %cst = arith.constant dense<0.000000e+00> : vector<16xf32>
    %3 = vector.multi_reduction <add>, %2, %cst [1] : vector<16x128xf32> to vector<16xf32>
    %4 = vector.shape_cast %3 : vector<16xf32> to vector<16x1xf32>
    %5 = arith.mulf %1, %1 : vector<16x128xf32>
    %cst_3 = arith.constant dense<0.000000e+00> : vector<16xf32>
    %6 = vector.multi_reduction <add>, %5, %cst_3 [1] : vector<16x128xf32> to vector<16xf32>
    %7 = vector.shape_cast %6 : vector<16xf32> to vector<16x1xf32>
    %8 = arith.mulf %0, %1 : vector<16x128xf32>
    %cst_4 = arith.constant dense<0.000000e+00> : vector<16xf32>
    %9 = vector.multi_reduction <add>, %8, %cst_4 [1] : vector<16x128xf32> to vector<16xf32>
    %10 = vector.shape_cast %9 : vector<16xf32> to vector<16x1xf32>
    %cst_5 = arith.constant 1.000000e-24 : f32
    %11 = vector.broadcast %cst_5 : f32 to vector<16x1xf32>
    %12 = arith.maximumf %4, %11 : vector<16x1xf32>
    %13 = math.rsqrt %12 : vector<16x1xf32>
    %cst_6 = arith.constant 1.000000e-24 : f32
    %14 = vector.broadcast %cst_6 : f32 to vector<16x1xf32>
    %15 = arith.maximumf %7, %14 : vector<16x1xf32>
    %16 = math.rsqrt %15 : vector<16x1xf32>
    %17 = arith.mulf %13, %16 : vector<16x1xf32>
    %18 = arith.mulf %10, %17 : vector<16x1xf32>
    %cst_7 = arith.constant 14.2857141 : f32
    %19 = vector.broadcast %cst_7 : f32 to vector<16x1xf32>
    %20 = arith.mulf %18, %19 : vector<16x1xf32>
    %21 = arith.mulf %13, %13 : vector<16x1xf32>
    %22 = arith.mulf %4, %21 : vector<16x1xf32>
    %cst_8 = arith.constant 14.2857141 : f32
    %23 = vector.broadcast %cst_8 : f32 to vector<16x1xf32>
    %24 = arith.mulf %22, %23 : vector<16x1xf32>
    %25 = arith.subf %24, %20 : vector<16x1xf32>
    %26 = math.exp %25 : vector<16x1xf32>
    %cst_9 = arith.constant 1.000000e+00 : f32
    %27 = vector.broadcast %cst_9 : f32 to vector<16x1xf32>
    %28 = arith.addf %27, %26 : vector<16x1xf32>
    %29 = math.log %28 : vector<16x1xf32>
    %c16_i32 = arith.constant 16 : i32
    %30 = arith.muli %arg0, %c16_i32 : i32
    %31 = tpu.iota {dimensions = array<i32: 0>} : vector<16x1xi32>
    %32 = vector.broadcast %30 : i32 to vector<16x1xi32>
    %33 = arith.addi %32, %31 : vector<16x1xi32>
    %c16_i32_10 = arith.constant 16 : i32
    %34 = vector.broadcast %c16_i32_10 : i32 to vector<16x1xi32>
    %35 = arith.cmpi slt, %33, %34 : vector<16x1xi32>
    %cst_11 = arith.constant 0.000000e+00 : f32
    %36 = vector.broadcast %cst_11 : f32 to vector<16x1xf32>
    %37 = arith.select %35, %29, %36 : vector<16x1xi1>, vector<16x1xf32>
    %c0_12 = arith.constant 0 : index
    %c0_13 = arith.constant 0 : index
    %38 = vector.load %arg3[%c0_12, %c0_13] : memref<16x1xf32, #tpu.memory_space<vmem>>, vector<16x1xf32>
    tpu.vector_store %arg3[%c0_12, %c0_13], %37 {strides = array<i32>} : memref<16x1xf32, #tpu.memory_space<vmem>>, vector<16x1xf32>,
    return
  }
  func.func @transform_0(%arg0: i32) -> (i32, i32) {
    %c0_i32 = arith.constant 0 : i32
    %c0_i32_0 = arith.constant 0 : i32
    return %arg0, %c0_i32 : i32, i32
  }
  func.func @transform_1(%arg0: i32) -> (i32, i32) {
    %c0_i32 = arith.constant 0 : i32
    %c0_i32_0 = arith.constant 0 : i32
    return %arg0, %c0_i32 : i32, i32
  }
  func.func @transform_2(%arg0: i32) -> (i32, i32) {
    %c0_i32 = arith.constant 0 : i32
    %c0_i32_0 = arith.constant 0 : i32
    return %arg0, %c0_i32 : i32, i32
  }
}

</mosaic_0001>

<llo_original>
// kernel: tpu_custom_call.1
$region0: #{tpu_custom_call.1}
  #allocation0 [shape = 'u32[]', space=smem, size = 0x4, offset = 0x4, fixed_abs, tag = 'smem constant byte address 0x4 - core index']
  #allocation1 [shape = 'u32[144,128]{1,0:T(1,128)}', space=vmem, size = 0x12000, scoped, tag = 'internal scratch']
  %s0 = inlined_call_operand.hbm [shape: f32[16,128], index: 0, kind: input, shape index: {}]
  %s1 = inlined_call_operand.hbm [shape: f32[16,128], index: 1, kind: input, shape index: {}]
  %s2 = inlined_call_operand.vmem [shape: f32[16,1], index: 2, kind: output, shape index: {}]
  %s3 = sld [smem:[#allocation0]]
  $region26: #{tpu_custom_call.1} parent=0
    _
  %s5 = ssub.s32 1, %s3
  %s6 = scalar_select 0, %s5, %s3
  $region1: #{tpu_custom_call.1} parent=0
    #allocation2 [shape = 'u8[8192]{0}', space=vmem, size = 0x2000, scoped, tag = 'input window, operand 0, single buffered']
    #allocation3 [shape = 's32[1]{0}', space=sflag, size = 0x4, scoped, tag = 'scoped memory for tpu_custom_call.1']
    #allocation4 [shape = 'u8[8192]{0}', space=vmem, size = 0x2000, scoped, tag = 'input window, operand 1, single buffered']
    #allocation5 [shape = 's32[1]{0}', space=sflag, size = 0x4, scoped, tag = 'scoped memory for tpu_custom_call.1']
    %7 = vsyncpa [#allocation3], 0
    %8 = vsyncpa [#allocation5], 0
    // Predicated region
    $region2: #{tpu_custom_call.1} parent=1 // pred_check
      _
    $region3: #{tpu_custom_call.1} parent=1 // pred_check_branch
      %10 = sbr.rel (0) target = $region5
    $region4: #{tpu_custom_call.1} parent=1 // pred_region
      %s12 = ssub.s32 256, 256
      %13 = vsyncadd [#allocation3], %s12
      %s14 = sshll.u32 [#allocation2], 4
      %s15 = int_to_ptr.vmem [resolvable:$true] %s14
      %20 = dma.hbm_to_vmem [thread:$0]  %s0, 256, %s15, [#allocation3], 128, 128, 8
    $region5: #{tpu_custom_call.1} parent=1 // pred_fallthru
      _
    // Predicated region
    $region6: #{tpu_custom_call.1} parent=1 // pred_check
      _
    $region7: #{tpu_custom_call.1} parent=1 // pred_check_branch
      %22 = sbr.rel (0) target = $region9
    $region8: #{tpu_custom_call.1} parent=1 // pred_region
      %s24 = ssub.s32 256, 256
      %25 = vsyncadd [#allocation5], %s24
      %s26 = sshll.u32 [#allocation4], 4
      %s27 = int_to_ptr.vmem [resolvable:$true] %s26
      %32 = dma.hbm_to_vmem [thread:$0]  %s1, 256, %s27, [#allocation5], 128, 128, 8
    $region9: #{tpu_custom_call.1} parent=1 // pred_fallthru
      _
    // Predicated region
    $region10: #{tpu_custom_call.1} parent=1 // pred_check
      _
    $region11: #{tpu_custom_call.1} parent=1 // pred_check_branch
      %34 = sbr.rel (0) target = $region13
    $region12: #{tpu_custom_call.1} parent=1 // pred_region
      %35 = dma.done [#allocation3], 256
    $region13: #{tpu_custom_call.1} parent=1 // pred_fallthru
      _
    // Predicated region
    $region14: #{tpu_custom_call.1} parent=1 // pred_check
      _
    $region15: #{tpu_custom_call.1} parent=1 // pred_check_branch
      %37 = sbr.rel (0) target = $region17
    $region16: #{tpu_custom_call.1} parent=1 // pred_region
      %38 = dma.done [#allocation5], 256
    $region17: #{tpu_custom_call.1} parent=1 // pred_fallthru
      _
    %v39 = vld [vmem:[#allocation2] sm:$0xff]
    %v40 = vld [vmem:[#allocation2 + $0x8] sm:$0xff]
    %v41 = vld [vmem:[#allocation4] sm:$0xff]
    %v42 = vld [vmem:[#allocation4 + $0x8] sm:$0xff]
    %v43 = vmul.f32 %v39, %v39
    %v44 = vmul.f32 %v40, %v40
    %45 = vadd.xlane.f32.xlu0 %v43
    %v46 = vpop.xlane.xlu0 %45
    %47 = vadd.xlane.f32.xlu0 %v44
    %v48 = vpop.xlane.xlu0 %47
    %v49 = vmul.f32 %v41, %v41
    %v50 = vmul.f32 %v42, %v42
    %51 = vadd.xlane.f32.xlu0 %v49
    %v52 = vpop.xlane.xlu0 %51
    %53 = vadd.xlane.f32.xlu0 %v50
    %v54 = vpop.xlane.xlu0 %53
    %v55 = vmul.f32 %v39, %v41
    %v56 = vmul.f32 %v40, %v42
    %57 = vadd.xlane.f32.xlu0 %v55
    %v58 = vpop.xlane.xlu0 %57
    %59 = vadd.xlane.f32.xlu0 %v56
    %v60 = vpop.xlane.xlu0 %59
    %v61 = vmax.f32 %v46, 1e-24
    %v62 = vmax.f32 %v48, 1e-24
    %v63 = vrsqrt.pop %v61
    %v64 = vrsqrt.pop %v62
    %v65 = vmax.f32 %v52, 1e-24
    %v66 = vmax.f32 %v54, 1e-24
    %v67 = vrsqrt.pop %v65
    %v68 = vrsqrt.pop %v66
    %v69 = vmul.f32 %v63, %v67
    %v70 = vmul.f32 %v64, %v68
    %v71 = vmul.f32 %v58, %v69
    %v72 = vmul.f32 %v60, %v70
    %v73 = vmul.f32 %v71, 14.285714
    %v74 = vmul.f32 %v72, 14.285714
    %v75 = vmul.f32 %v63, %v63
    %v76 = vmul.f32 %v64, %v64
    %v77 = vmul.f32 %v46, %v75
    %v78 = vmul.f32 %v48, %v76
    %v79 = vmul.f32 %v77, 14.285714
    %v80 = vmul.f32 %v78, 14.285714
    %v81 = vsub.f32 %v79, %v73
    %v82 = vsub.f32 %v80, %v74
    %v83 = vmul.f32 %v81, 1.442695
    %v84 = vpow.pop %v83
    %v85 = vmul.f32 %v82, 1.442695
    %v86 = vpow.pop %v85
    %v87 = vadd.f32 %v84, 1.0
    %v88 = vadd.f32 %v86, 1.0
    %v89 = vlog2.pop %v87
    %v90 = vmul.f32 %v89, 0.6931472
    %v91 = vlog2.pop %v88
    %v92 = vmul.f32 %v91, 0.6931472
    %s93 = smul.u32 0, 16
    %v94 = vlaneseq
    %v95 = vshrl.u32 %v94, 7
    %v96 = vadd.s32 %v95, 8
    %v97 = vstv %s93
    %v98 = vadd.s32 %v97, %v95
    %v99 = vadd.s32 %v97, %v96
    %vm100 = vcmp.lt.s32.totalorder %v98, 16
    %vm101 = vcmp.lt.s32.totalorder %v99, 16
    %v102 = vsel %vm100, %v90, 0.0
    %v103 = vsel %vm101, %v92, 0.0
    %vm104 = vcmask 7168
    %105 = vst.msk [vmem:[%s2] sm:$0xff] %vm104, %v102
    %106 = vst.msk [vmem:[%s2 + $0x8] sm:$0xff] %vm104, %v103
    // Predicated region
    $region18: #{tpu_custom_call.1} parent=1 // pred_check
      _
    $region19: #{tpu_custom_call.1} parent=1 // pred_check_branch
      %108 = sbr.rel (0) target = $region21
    $region20: #{tpu_custom_call.1} parent=1 // pred_region
      _
    $region21: #{tpu_custom_call.1} parent=1 // pred_fallthru
      _
    // Predicated region
    $region22: #{tpu_custom_call.1} parent=1 // pred_check
      _
    $region23: #{tpu_custom_call.1} parent=1 // pred_check_branch
      %110 = sbr.rel (0) target = $region25
    $region24: #{tpu_custom_call.1} parent=1 // pred_region
      _
    $region25: #{tpu_custom_call.1} parent=1 // pred_fallthru
      _
    %111 = vsyncpa [#allocation3], 1
    %112 = vsyncpa [#allocation5], 1

</llo_original>
